<compile_context>
chip_gen: v7x
topology: tpu7x:2x2x1
jax: 0.10.0
libtpu: 0.0.40
codegen_flags: <defaults>
</compile_context>

<pallas_src>
import jax
import jax.numpy as jnp
from jax import lax
from jax.experimental import pallas as pl
from jax.experimental.pallas import tpu as pltpu


TM = 512          # node-row tile (output rows); >=2 i-blocks on real graphs -> megacore
TK = 512          # reduction tile over source nodes
LANE = 128        # lane width; feature dims padded to a multiple of this
HEAD_W = 128      # lane-dense width of the fused classifier projection output


def _round_up(x, m):
    return ((x + m - 1) // m) * m


# ----------------------------------------------------------------------------
# Kernel 1: XW = (x @ W_gcn) * dinv[:, None]   (computed once, emitted as bf16)
#   The D^-1/2 *column* scale of the normalized adjacency is folded in here.
# ----------------------------------------------------------------------------
def _xw_kernel(x_ref, w_ref, dinv_ref, o_ref):
    xw = jnp.dot(x_ref[...], w_ref[...], preferred_element_type=jnp.float32)
    o_ref[...] = (xw * dinv_ref[...]).astype(o_ref.dtype)


def compute_xw(x_pad, w_pad, dinv_pad):
    np_, cin = x_pad.shape
    coutp = w_pad.shape[1]
    return pl.pallas_call(
        _xw_kernel,
        out_shape=jax.ShapeDtypeStruct((np_, coutp), jnp.bfloat16),
        grid=(np_ // TM,),
        in_specs=[
            pl.BlockSpec((TM, cin), lambda i: (i, 0)),
            pl.BlockSpec((cin, coutp), lambda i: (0, 0)),
            pl.BlockSpec((TM, 1), lambda i: (i, 0)),
        ],
        out_specs=pl.BlockSpec((TM, coutp), lambda i: (i, 0)),
        compiler_params=pltpu.CompilerParams(
            dimension_semantics=("parallel",)
        ),
    )(x_pad, w_pad, dinv_pad)


# ----------------------------------------------------------------------------
# Kernel 2: fused GCN aggregation + normalization + ReLU + classifier head
#   acc  = / += A_tile(bf16) @ XW_slice(bf16)          (f32 accumulate over k)
#   h    = relu(dinv_row * acc + b_gcn)                (finalize; row scale folded)
#   p    = h @ Wsd_pad  -> [TM, 128] lane-dense bf16   (finalize)
#   XW is VMEM-resident (constant block index) and sliced per k in the body.
# ----------------------------------------------------------------------------
def _gcn_agg_head_kernel(a_ref, xw_ref, dinv_ref, bg_ref, wsd_ref, p_ref, acc_ref):
    k = pl.program_id(1)
    ks = pl.multiple_of(k * TK, TK)
    prod = jnp.dot(
        a_ref[...], xw_ref[pl.ds(ks, TK), :], preferred_element_type=jnp.float32
    )

    @pl.when(k == 0)
    def _():
        acc_ref[...] = prod

    @pl.when(k != 0)
    def _():
        acc_ref[...] += prod

    @pl.when(k == pl.num_programs(1) - 1)
    def _():
        h = jnp.maximum(dinv_ref[...] * acc_ref[...] + bg_ref[...], 0.0)
        p_ref[...] = jnp.dot(
            h, wsd_ref[...], preferred_element_type=jnp.float32
        ).astype(p_ref.dtype)


def gcn_agg_head(a_raw_bf16, xw_bf16, dinv_pad, b_gcn_pad, wsd_pad):
    np_ = a_raw_bf16.shape[0]
    coutp = xw_bf16.shape[1]

    # HBM bytes: A once (bf16), XW once (resident bf16), p writeback (bf16), small consts.
    cost = pl.CostEstimate(
        flops=2 * np_ * np_ * coutp + 2 * np_ * coutp * HEAD_W,
        transcendentals=0,
        bytes_accessed=(np_ * np_ * 2
                        + np_ * coutp * 2
                        + np_ * 4
                        + coutp * 4
                        + coutp * HEAD_W * 4
                        + np_ * HEAD_W * 2),
    )

    # VMEM budget: 3x A buf + 2x resident XW + acc + double-buffered small operands.
    vmem_bytes = (3 * TM * TK * 2
                  + 2 * np_ * coutp * 2
                  + TM * coutp * 4
                  + 2 * (TM * 4 + coutp * 4 + coutp * HEAD_W * 4 + TM * HEAD_W * 2))
    vmem_limit = int(min(max(2 * vmem_bytes, 32 << 20), 48 << 20))  # stays legal on v7x (64 MiB)

    return pl.pallas_call(
        _gcn_agg_head_kernel,
        out_shape=jax.ShapeDtypeStruct((np_, HEAD_W), jnp.bfloat16),
        grid=(np_ // TM, np_ // TK),
        in_specs=[
            # Dominant HBM stream: bf16 adjacency tiles, 3-deep buffering.
            pl.BlockSpec((TM, TK), lambda i, k: (i, k),
                         pipeline_mode=pl.Buffered(3)),
            # XW: full-array block, constant index -> DMA'd once, VMEM-resident.
            pl.BlockSpec((np_, coutp), lambda i, k: (0, 0)),
            pl.BlockSpec((TM, 1), lambda i, k: (i, 0)),
            pl.BlockSpec((1, coutp), lambda i, k: (0, 0)),
            pl.BlockSpec((coutp, HEAD_W), lambda i, k: (0, 0)),
        ],
        out_specs=pl.BlockSpec((TM, HEAD_W), lambda i, k: (i, 0)),
        scratch_shapes=[pltpu.VMEM((TM, coutp), jnp.float32)],
        compiler_params=pltpu.CompilerParams(
            dimension_semantics=("parallel", "arbitrary"),
            vmem_limit_bytes=vmem_limit,
        ),
        cost_estimate=cost,
    )(a_raw_bf16, xw_bf16, dinv_pad, b_gcn_pad, wsd_pad)


# ----------------------------------------------------------------------------
# Glue: raw adjacency (one bf16 scatter) + O(E) degree, negative sampling
# ----------------------------------------------------------------------------
def build_adjacency_and_dinv(edge_index, num_nodes, num_nodes_padded):
    """Raw (A + remaining-self-loops) as a padded bf16 matrix (ONE O(N^2) pass)
    plus D^-1/2 computed in O(E); the D^-1/2 scaling itself is applied inside
    the Pallas kernels (column scale in XW, row scale in the finalize)."""
    # TODO(synk): for large graphs replace the dense N^2 matrix with edge-list
    # aggregation (scalar-prefetched sorted edges + segment-sum) so HBM traffic
    # scales with E*Cout instead of N^2.
    src, dst = edge_index[0], edge_index[1]
    e = src.shape[0]
    ones_e = jnp.ones((e,), jnp.float32)
    idx = jnp.arange(num_nodes, dtype=src.dtype)

    # add_remaining_self_loops semantics: weight-1 self loop only for nodes
    # that do not already have one; existing edge multiplicities are preserved.
    self_cnt = jnp.zeros((num_nodes,), jnp.float32).at[dst].add(
        jnp.where(src == dst, 1.0, 0.0))
    self_w = jnp.where(self_cnt > 0.0, 0.0, 1.0)

    rows = jnp.concatenate([dst, idx])
    cols = jnp.concatenate([src, idx])
    vals = jnp.concatenate([ones_e, self_w]).astype(jnp.bfloat16)
    a = jnp.zeros((num_nodes_padded, num_nodes_padded), jnp.bfloat16)
    a = a.at[rows, cols].add(vals)           # single scatter into padded buffer

    deg = jnp.zeros((num_nodes,), jnp.float32).at[dst].add(ones_e) + self_w
    dinv = jnp.where(deg > 0.0, lax.rsqrt(deg), 0.0)
    dinv_pad = jnp.pad(dinv, (0, num_nodes_padded - num_nodes)).reshape(-1, 1)
    return a, dinv_pad


def negative_sampling(key, num_nodes, num_neg_samples):
    # TODO(synk): exact PyG negative_sampling rejects existing edges/self-loops;
    # here we draw uniform random (src, dst) pairs deterministically from `key`.
    k1, k2 = jax.random.split(key)
    src = jax.random.randint(k1, (num_neg_samples,), 0, num_nodes, dtype=jnp.int32)
    dst = jax.random.randint(k2, (num_neg_samples,), 0, num_nodes, dtype=jnp.int32)
    return jnp.stack([src, dst], axis=0)


# ----------------------------------------------------------------------------
# EdgeClassifier forward
# ----------------------------------------------------------------------------
def edge_classifier_forward(params, x, edge_index, neg_key):
    num_nodes, _ = x.shape
    cout = params["gcn_w"].shape[1]
    num_pos = edge_index.shape[1]

    np_ = _round_up(max(num_nodes, 1), max(TM, TK))
    coutp = _round_up(cout, LANE)

    # ---- pad to tile / lane boundaries (zero padding, exact) ----------------
    x_pad = jnp.pad(x, ((0, np_ - num_nodes), (0, 0))).astype(jnp.bfloat16)
    wg_pad = jnp.pad(params["gcn_w"],
                     ((0, 0), (0, coutp - cout))).astype(jnp.bfloat16)
    bg_pad = jnp.pad(params["gcn_b"], (0, coutp - cout)).reshape(1, coutp)

    # Classifier weights folded in front of the per-edge gather (linearity):
    #   logits = h[src] @ Wc[:C] + h[dst] @ Wc[C:] + bc
    w_src = params["cls_w"][:cout]                       # [C, 2]
    w_dst = params["cls_w"][cout:]                       # [C, 2]
    wsd = jnp.concatenate([w_src, w_dst], axis=1)        # [C, 4]
    wsd_pad = jnp.pad(wsd, ((0, coutp - cout), (0, HEAD_W - 4)))

    # ---- adjacency pattern + degrees, then the two Pallas kernels ------------
    a_raw, dinv_pad = build_adjacency_and_dinv(edge_index, num_nodes, np_)
    xw = compute_xw(x_pad, wg_pad, dinv_pad)                     # [Np, Cp] bf16
    p = gcn_agg_head(a_raw, xw, dinv_pad, bg_pad, wsd_pad)       # [Np, 128] bf16

    # ---- positive + negative edges, tiny [2E, 2] gather + add ----------------
    # NOTE: padded node rows hold p = relu(b_gcn) @ Wsd != 0; harmless because
    # every edge index is < num_nodes.
    neg_edge_index = negative_sampling(neg_key, num_nodes, num_pos)
    total_edge_index = jnp.concatenate([edge_index, neg_edge_index], axis=1)
    p4 = p[:, :4].astype(jnp.float32)        # only 4 of 128 lanes are meaningful
    logits = (
        p4[total_edge_index[0], 0:2]
        + p4[total_edge_index[1], 2:4]
        + params["cls_b"][None, :]
    )
    return logits


def init_params(key, in_channels, out_channels):
    k1, k2, k3, k4 = jax.random.split(key, 4)
    return {
        "gcn_w": jax.random.normal(k1, (in_channels, out_channels), jnp.float32) * 0.1,
        "gcn_b": jax.random.normal(k2, (out_channels,), jnp.float32) * 0.1,
        "cls_w": jax.random.normal(k3, (2 * out_channels, 2), jnp.float32) * 0.1,
        "cls_b": jax.random.normal(k4, (2,), jnp.float32) * 0.1,
    }


if __name__ == "__main__":
    key = jax.random.PRNGKey(0)
    k_param, k_x, k_edge, k_neg = jax.random.split(key, 4)

    num_nodes = 16
    in_channels = 8
    out_channels = 32
    num_edges = 10

    params = init_params(k_param, in_channels, out_channels)
    x = jax.random.normal(k_x, (num_nodes, in_channels), jnp.float32)
    edge_index = jax.random.randint(
        k_edge, (2, num_edges), 0, num_nodes, dtype=jnp.int32
    )

    logits = edge_classifier_forward(params, x, edge_index, k_neg)
    logits = jax.block_until_ready(logits)
    assert logits.shape == (2 * num_edges, 2)
    print("KERNEL_OK")
</pallas_src>

<mosaic_0001>
module attributes {stable_mosaic.version = 11 : i64} {
  func.func @_xw_kernel(%arg0: i32, %arg1: memref<512x8xbf16, #tpu.memory_space<vmem>>, %arg2: memref<8x128xbf16, #tpu.memory_space<vmem>>, %arg3: memref<512x1xf32, #tpu.memory_space<vmem>>, %arg4: memref<512x128xbf16, #tpu.memory_space<vmem>>) attributes {dimension_semantics = [#tpu.dimension_semantics<parallel>], iteration_bounds = array<i64: 1>, scalar_prefetch = 0 : i64, scratch_operands = 0 : i64, tpu.core_type = #tpu.core_type<tc>, window_params = [{transform_indices = @transform_0, window_bounds = array<i64: 512, 8>}, {pipeline_mode = #tpu.pipeline_mode<synchronous>, transform_indices = @transform_1, window_bounds = array<i64: 8, 128>}, {transform_indices = @transform_2, window_bounds = array<i64: 512, 1>}, {transform_indices = @transform_3, window_bounds = array<i64: 512, 128>}]} {
    %c0 = arith.constant 0 : index
    %c0_0 = arith.constant 0 : index
    %0 = vector.load %arg1[%c0, %c0_0] : memref<512x8xbf16, #tpu.memory_space<vmem>>, vector<512x8xbf16>
    %c0_1 = arith.constant 0 : index
    %c0_2 = arith.constant 0 : index
    %1 = vector.load %arg2[%c0_1, %c0_2] : memref<8x128xbf16, #tpu.memory_space<vmem>>, vector<8x128xbf16>
    %cst = arith.constant dense<0.000000e+00> : vector<512x128xf32>
    %2 = tpu.matmul %0, %1, %cst {dimension_numbers = #tpu.dot_dimension_numbers<[1], [0], [0], [1], [0, 0, 1, 1], [], []>} : vector<512x8xbf16>, vector<8x128xbf16>, vector<512x128xf32> -> vector<512x128xf32>
    %c0_3 = arith.constant 0 : index
    %c0_4 = arith.constant 0 : index
    %3 = vector.load %arg3[%c0_3, %c0_4] : memref<512x1xf32, #tpu.memory_space<vmem>>, vector<512x1xf32>
    %4 = vector.broadcast %3 : vector<512x1xf32> to vector<512x128xf32>
    %5 = arith.mulf %2, %4 : vector<512x128xf32>
    %6 = arith.truncf %5 : vector<512x128xf32> to vector<512x128xbf16>
    %c0_5 = arith.constant 0 : index
    %c0_6 = arith.constant 0 : index
    %7 = vector.load %arg4[%c0_5, %c0_6] : memref<512x128xbf16, #tpu.memory_space<vmem>>, vector<512x128xbf16>
    tpu.vector_store %arg4[%c0_5, %c0_6], %6 {strides = array<i32>} : memref<512x128xbf16, #tpu.memory_space<vmem>>, vector<512x128xbf16>,
    return
  }
  func.func @transform_0(%arg0: i32) -> (i32, i32) {
    %c0_i32 = arith.constant 0 : i32
    %c0_i32_0 = arith.constant 0 : i32
    return %arg0, %c0_i32 : i32, i32
  }
  func.func @transform_1(%arg0: i32) -> (i32, i32) {
    %c0_i32 = arith.constant 0 : i32
    %c0_i32_0 = arith.constant 0 : i32
    %c0_i32_1 = arith.constant 0 : i32
    return %c0_i32, %c0_i32_0 : i32, i32
  }
  func.func @transform_2(%arg0: i32) -> (i32, i32) {
    %c0_i32 = arith.constant 0 : i32
    %c0_i32_0 = arith.constant 0 : i32
    return %arg0, %c0_i32 : i32, i32
  }
  func.func @transform_3(%arg0: i32) -> (i32, i32) {
    %c0_i32 = arith.constant 0 : i32
    %c0_i32_0 = arith.constant 0 : i32
    return %arg0, %c0_i32 : i32, i32
  }
}

</mosaic_0001>

<llo_original>
// kernel: tpu_custom_call.1
$region0: #{tpu_custom_call.1}
  #allocation0 [shape = 'u32[]', space=smem, size = 0x4, offset = 0x4, fixed_abs, tag = 'smem constant byte address 0x4 - core index']
  #allocation1 [shape = 'u32[144,128]{1,0:T(1,128)}', space=vmem, size = 0x12000, scoped, tag = 'internal scratch']
  %s0 = inlined_call_operand.vmem [shape: bf16[512,8], index: 0, kind: input, shape index: {}]
  %s1 = inlined_call_operand.vmem [shape: bf16[8,128], index: 1, kind: input, shape index: {}]
  %s2 = inlined_call_operand.vmem [shape: f32[512,1], index: 2, kind: input, shape index: {}]
  %s3 = inlined_call_operand.hbm [shape: bf16[512,128], index: 3, kind: output, shape index: {}]
  %s4 = sld [smem:[#allocation0]]
  $region22: #{tpu_custom_call.1} parent=0
    _
  %s6 = ssub.s32 1, %s4
  %s7 = scalar_select 0, %s6, %s4
  $region1: #{tpu_custom_call.1} parent=0
    #allocation2 [shape = 'u8[131072]{0}', space=vmem, size = 0x20000, scoped, tag = 'output window, operand 0, single buffered']
    #allocation3 [shape = 's32[1]{0}', space=sflag, size = 0x4, scoped, tag = 'scoped memory for tpu_custom_call.1']
    %8 = vsyncpa [#allocation3], 0
    // Predicated region
    $region2: #{tpu_custom_call.1} parent=1 // pred_check
      _
    $region3: #{tpu_custom_call.1} parent=1 // pred_check_branch
      %10 = sbr.rel (0) target = $region5
    $region4: #{tpu_custom_call.1} parent=1 // pred_region
      _
    $region5: #{tpu_custom_call.1} parent=1 // pred_fallthru
      _
    // Predicated region
    $region6: #{tpu_custom_call.1} parent=1 // pred_check
      _
    $region7: #{tpu_custom_call.1} parent=1 // pred_check_branch
      %12 = sbr.rel (0) target = $region9
    $region8: #{tpu_custom_call.1} parent=1 // pred_region
      _
    $region9: #{tpu_custom_call.1} parent=1 // pred_fallthru
      _
    // Predicated region
    $region10: #{tpu_custom_call.1} parent=1 // pred_check
      _
    $region11: #{tpu_custom_call.1} parent=1 // pred_check_branch
      %14 = sbr.rel (0) target = $region13
    $region12: #{tpu_custom_call.1} parent=1 // pred_region
      _
    $region13: #{tpu_custom_call.1} parent=1 // pred_fallthru
      _
    %v16 = vld [vmem:[%s0] sm:$0xf]
    %v17 = vld [vmem:[%s0 + $0x4] sm:$0xf]
    %v18 = vld [vmem:[%s0 + $0x8] sm:$0xf]
    %v19 = vld [vmem:[%s0 + $0xc] sm:$0xf]
    %v20 = vld [vmem:[%s0 + $0x10] sm:$0xf]
    %v21 = vld [vmem:[%s0 + $0x14] sm:$0xf]
    %v22 = vld [vmem:[%s0 + $0x18] sm:$0xf]
    %v23 = vld [vmem:[%s0 + $0x1c] sm:$0xf]
    %v24 = vld [vmem:[%s0 + $0x20] sm:$0xf]
    %v25 = vld [vmem:[%s0 + $0x24] sm:$0xf]
    %v26 = vld [vmem:[%s0 + $0x28] sm:$0xf]
    %v27 = vld [vmem:[%s0 + $0x2c] sm:$0xf]
    %v28 = vld [vmem:[%s0 + $0x30] sm:$0xf]
    %v29 = vld [vmem:[%s0 + $0x34] sm:$0xf]
    %v30 = vld [vmem:[%s0 + $0x38] sm:$0xf]
    %v31 = vld [vmem:[%s0 + $0x3c] sm:$0xf]
    %v32 = vld [vmem:[%s0 + $0x40] sm:$0xf]
    %v33 = vld [vmem:[%s0 + $0x44] sm:$0xf]
    %v34 = vld [vmem:[%s0 + $0x48] sm:$0xf]
    %v35 = vld [vmem:[%s0 + $0x4c] sm:$0xf]
    %v36 = vld [vmem:[%s0 + $0x50] sm:$0xf]
    %v37 = vld [vmem:[%s0 + $0x54] sm:$0xf]
    %v38 = vld [vmem:[%s0 + $0x58] sm:$0xf]
    %v39 = vld [vmem:[%s0 + $0x5c] sm:$0xf]
    %v40 = vld [vmem:[%s0 + $0x60] sm:$0xf]
    %v41 = vld [vmem:[%s0 + $0x64] sm:$0xf]
    %v42 = vld [vmem:[%s0 + $0x68] sm:$0xf]
    %v43 = vld [vmem:[%s0 + $0x6c] sm:$0xf]
    %v44 = vld [vmem:[%s0 + $0x70] sm:$0xf]
    %v45 = vld [vmem:[%s0 + $0x74] sm:$0xf]
    %v46 = vld [vmem:[%s0 + $0x78] sm:$0xf]
    %v47 = vld [vmem:[%s0 + $0x7c] sm:$0xf]
    %v48 = vld [vmem:[%s0 + $0x80] sm:$0xf]
    %v49 = vld [vmem:[%s0 + $0x84] sm:$0xf]
    %v50 = vld [vmem:[%s0 + $0x88] sm:$0xf]
    %v51 = vld [vmem:[%s0 + $0x8c] sm:$0xf]
    %v52 = vld [vmem:[%s0 + $0x90] sm:$0xf]
    %v53 = vld [vmem:[%s0 + $0x94] sm:$0xf]
    %v54 = vld [vmem:[%s0 + $0x98] sm:$0xf]
    %v55 = vld [vmem:[%s0 + $0x9c] sm:$0xf]
    %v56 = vld [vmem:[%s0 + $0xa0] sm:$0xf]
    %v57 = vld [vmem:[%s0 + $0xa4] sm:$0xf]
    %v58 = vld [vmem:[%s0 + $0xa8] sm:$0xf]
    %v59 = vld [vmem:[%s0 + $0xac] sm:$0xf]
    %v60 = vld [vmem:[%s0 + $0xb0] sm:$0xf]
    %v61 = vld [vmem:[%s0 + $0xb4] sm:$0xf]
    %v62 = vld [vmem:[%s0 + $0xb8] sm:$0xf]
    %v63 = vld [vmem:[%s0 + $0xbc] sm:$0xf]
    %v64 = vld [vmem:[%s0 + $0xc0] sm:$0xf]
    %v65 = vld [vmem:[%s0 + $0xc4] sm:$0xf]
    %v66 = vld [vmem:[%s0 + $0xc8] sm:$0xf]
    %v67 = vld [vmem:[%s0 + $0xcc] sm:$0xf]
    %v68 = vld [vmem:[%s0 + $0xd0] sm:$0xf]
    %v69 = vld [vmem:[%s0 + $0xd4] sm:$0xf]
    %v70 = vld [vmem:[%s0 + $0xd8] sm:$0xf]
    %v71 = vld [vmem:[%s0 + $0xdc] sm:$0xf]
    %v72 = vld [vmem:[%s0 + $0xe0] sm:$0xf]
    %v73 = vld [vmem:[%s0 + $0xe4] sm:$0xf]
    %v74 = vld [vmem:[%s0 + $0xe8] sm:$0xf]
    %v75 = vld [vmem:[%s0 + $0xec] sm:$0xf]
    %v76 = vld [vmem:[%s0 + $0xf0] sm:$0xf]
    %v77 = vld [vmem:[%s0 + $0xf4] sm:$0xf]
    %v78 = vld [vmem:[%s0 + $0xf8] sm:$0xf]
    %v79 = vld [vmem:[%s0 + $0xfc] sm:$0xf]
    %v80 = vld [vmem:[%s1] sm:$0xf]
    %v145 = vunpack.c.l.b16 %v16
    %v146 = vunpack.c.l.b16 %v17
    %v147 = vunpack.c.l.b16 %v18
    %v148 = vunpack.c.l.b16 %v19
    %v149 = vunpack.c.l.b16 %v20
    %v150 = vunpack.c.l.b16 %v21
    %v151 = vunpack.c.l.b16 %v22
    %v152 = vunpack.c.l.b16 %v23
    %v153 = vunpack.c.l.b16 %v24
    %v154 = vunpack.c.l.b16 %v25
    %v155 = vunpack.c.l.b16 %v26
    %v156 = vunpack.c.l.b16 %v27
    %v157 = vunpack.c.l.b16 %v28
    %v158 = vunpack.c.l.b16 %v29
    %v159 = vunpack.c.l.b16 %v30
    %v160 = vunpack.c.l.b16 %v31
    %v161 = vunpack.c.l.b16 %v32
    %v162 = vunpack.c.l.b16 %v33
    %v163 = vunpack.c.l.b16 %v34
    %v164 = vunpack.c.l.b16 %v35
    %v165 = vunpack.c.l.b16 %v36
    %v166 = vunpack.c.l.b16 %v37
    %v167 = vunpack.c.l.b16 %v38
    %v168 = vunpack.c.l.b16 %v39
    %v169 = vunpack.c.l.b16 %v40
    %v170 = vunpack.c.l.b16 %v41
    %v171 = vunpack.c.l.b16 %v42
    %v172 = vunpack.c.l.b16 %v43
    %v173 = vunpack.c.l.b16 %v44
    %v174 = vunpack.c.l.b16 %v45
    %v175 = vunpack.c.l.b16 %v46
    %v176 = vunpack.c.l.b16 %v47
    %v177 = vunpack.c.l.b16 %v48
    %v178 = vunpack.c.l.b16 %v49
    %v179 = vunpack.c.l.b16 %v50
    %v180 = vunpack.c.l.b16 %v51
    %v181 = vunpack.c.l.b16 %v52
    %v182 = vunpack.c.l.b16 %v53
    %v183 = vunpack.c.l.b16 %v54
    %v184 = vunpack.c.l.b16 %v55
    %v185 = vunpack.c.l.b16 %v56
    %v186 = vunpack.c.l.b16 %v57
    %v187 = vunpack.c.l.b16 %v58
    %v188 = vunpack.c.l.b16 %v59
    %v189 = vunpack.c.l.b16 %v60
    %v190 = vunpack.c.l.b16 %v61
    %v191 = vunpack.c.l.b16 %v62
    %v192 = vunpack.c.l.b16 %v63
    %v193 = vunpack.c.l.b16 %v64
    %v194 = vunpack.c.l.b16 %v65
    %v195 = vunpack.c.l.b16 %v66
    %v196 = vunpack.c.l.b16 %v67
    %v197 = vunpack.c.l.b16 %v68
    %v198 = vunpack.c.l.b16 %v69
    %v199 = vunpack.c.l.b16 %v70
    %v200 = vunpack.c.l.b16 %v71
    %v201 = vunpack.c.l.b16 %v72
    %v202 = vunpack.c.l.b16 %v73
    %v203 = vunpack.c.l.b16 %v74
    %v204 = vunpack.c.l.b16 %v75
    %v205 = vunpack.c.l.b16 %v76
    %v206 = vunpack.c.l.b16 %v77
    %v207 = vunpack.c.l.b16 %v78
    %v208 = vunpack.c.l.b16 %v79
    %v209 = vpack.c.b16 %v146, %v145
    %v210 = vpack.c.b16 %v148, %v147
    %v211 = vpack.c.b16 %v150, %v149
    %v212 = vpack.c.b16 %v152, %v151
    %v213 = vpack.c.b16 %v154, %v153
    %v214 = vpack.c.b16 %v156, %v155
    %v215 = vpack.c.b16 %v158, %v157
    %v216 = vpack.c.b16 %v160, %v159
    %v217 = vpack.c.b16 %v162, %v161
    %v218 = vpack.c.b16 %v164, %v163
    %v219 = vpack.c.b16 %v166, %v165
    %v220 = vpack.c.b16 %v168, %v167
    %v221 = vpack.c.b16 %v170, %v169
    %v222 = vpack.c.b16 %v172, %v171
    %v223 = vpack.c.b16 %v174, %v173
    %v224 = vpack.c.b16 %v176, %v175
    %v225 = vpack.c.b16 %v178, %v177
    %v226 = vpack.c.b16 %v180, %v179
    %v227 = vpack.c.b16 %v182, %v181
    %v228 = vpack.c.b16 %v184, %v183
    %v229 = vpack.c.b16 %v186, %v185
    %v230 = vpack.c.b16 %v188, %v187
    %v231 = vpack.c.b16 %v190, %v189
    %v232 = vpack.c.b16 %v192, %v191
    %v233 = vpack.c.b16 %v194, %v193
    %v234 = vpack.c.b16 %v196, %v195
    %v235 = vpack.c.b16 %v198, %v197
    %v236 = vpack.c.b16 %v200, %v199
    %v237 = vpack.c.b16 %v202, %v201
    %v238 = vpack.c.b16 %v204, %v203
    %v239 = vpack.c.b16 %v206, %v205
    %v240 = vpack.c.b16 %v208, %v207
    %vm241 = vcmask 64512
    %v243 = vsel %vm241, %v209, 0
    %v246 = vsel %vm241, %v210, 0
    %v249 = vsel %vm241, %v211, 0
    %v252 = vsel %vm241, %v212, 0
    %v255 = vsel %vm241, %v213, 0
    %v258 = vsel %vm241, %v214, 0
    %v261 = vsel %vm241, %v215, 0
    %v264 = vsel %vm241, %v216, 0
    %v267 = vsel %vm241, %v217, 0
    %v270 = vsel %vm241, %v218, 0
    %v273 = vsel %vm241, %v219, 0
    %v276 = vsel %vm241, %v220, 0
    %v279 = vsel %vm241, %v221, 0
    %v282 = vsel %vm241, %v222, 0
    %v285 = vsel %vm241, %v223, 0
    %v288 = vsel %vm241, %v224, 0
    %v291 = vsel %vm241, %v225, 0
    %v294 = vsel %vm241, %v226, 0
    %v297 = vsel %vm241, %v227, 0
    %v300 = vsel %vm241, %v228, 0
    %v303 = vsel %vm241, %v229, 0
    %v306 = vsel %vm241, %v230, 0
    %v309 = vsel %vm241, %v231, 0
    %v312 = vsel %vm241, %v232, 0
    %v315 = vsel %vm241, %v233, 0
    %v318 = vsel %vm241, %v234, 0
    %v321 = vsel %vm241, %v235, 0
    %v324 = vsel %vm241, %v236, 0
    %v327 = vsel %vm241, %v237, 0
    %v330 = vsel %vm241, %v238, 0
    %v333 = vsel %vm241, %v239, 0
    %v336 = vsel %vm241, %v240, 0
    %vm338 = vcmask 1043456
    %v340 = vsel %vm338, %v80, 0
    %342 = vmatprep.subr.bf16.mxu0 0
    %343 = vmatpush1.bf16.msra.mxu0 %v340
    %344 = vmatprep.subr.bf16.mxu0 0
    %345 = vmatpush1.bf16.msra.mxu0 0
    %346 = vmatprep.subr.bf16.mxu0 0
    %347 = vmatpush1.bf16.msra.mxu0 0
    %348 = vmatprep.subr.bf16.mxu0 0
    %349 = vmatpush1.bf16.msra.mxu0 0
    %350 = vmatprep.subr.bf16.mxu0 0
    %351 = vmatpush1.bf16.msra.mxu0 0
    %352 = vmatprep.subr.bf16.mxu0 0
    %353 = vmatpush1.bf16.msra.mxu0 0
    %354 = vmatprep.subr.bf16.mxu0 0
    %355 = vmatpush1.bf16.msra.mxu0 0
    %356 = vmatprep.subr.bf16.mxu0 0
    %357 = vmatpush1.bf16.msra.mxu0 0
    %358 = vmatprep.subr.bf16.mxu0 0
    %359 = vmatpush1.bf16.msra.mxu0 0
    %360 = vmatprep.subr.bf16.mxu0 0
    %361 = vmatpush1.bf16.msra.mxu0 0
    %362 = vmatprep.subr.bf16.mxu0 0
    %363 = vmatpush1.bf16.msra.mxu0 0
    %364 = vmatprep.subr.bf16.mxu0 0
    %365 = vmatpush1.bf16.msra.mxu0 0
    %366 = vmatprep.subr.bf16.mxu0 0
    %367 = vmatpush1.bf16.msra.mxu0 0
    %368 = vmatprep.subr.bf16.mxu0 0
    %369 = vmatpush1.bf16.msra.mxu0 0
    %370 = vmatprep.subr.bf16.mxu0 0
    %371 = vmatpush1.bf16.msra.mxu0 0
    %372 = vmatprep.subr.bf16.mxu0 0
    %373 = vmatpush1.bf16.msra.mxu0 0
    %374 = vmatprep.mubr.bf16.mxu0 0
    %375 = vmatmul.mubr.bf16.gmra.mrb[0].mxu0 %v243
    %v376 = vpop.f32.mrb[0].mxu0
    %v377 = vadd.f32 0.0, %v376
    %v378 = vpop.f32.mrb[0].mxu0
    %v379 = vpop.f32.mrb[0].mxu0
    %v380 = vadd.f32 0.0, %v379
    %v381 = vpop.f32.mrb[0].mxu0
    %382 = vmatprep.mubr.bf16.mxu0 0
    %383 = vmatmul.mubr.bf16.gmra.mrb[0].mxu0 %v246
    %v384 = vpop.f32.mrb[0].mxu0
    %v385 = vadd.f32 0.0, %v384
    %v386 = vpop.f32.mrb[0].mxu0
    %v387 = vpop.f32.mrb[0].mxu0
    %v388 = vadd.f32 0.0, %v387
    %v389 = vpop.f32.mrb[0].mxu0
    %390 = vmatprep.mubr.bf16.mxu0 0
    %391 = vmatmul.mubr.bf16.gmra.mrb[0].mxu0 %v249
    %v392 = vpop.f32.mrb[0].mxu0
    %v393 = vadd.f32 0.0, %v392
    %v394 = vpop.f32.mrb[0].mxu0
    %v395 = vpop.f32.mrb[0].mxu0
    %v396 = vadd.f32 0.0, %v395
    %v397 = vpop.f32.mrb[0].mxu0
    %398 = vmatprep.mubr.bf16.mxu0 0
    %399 = vmatmul.mubr.bf16.gmra.mrb[0].mxu0 %v252
    %v400 = vpop.f32.mrb[0].mxu0
    %v401 = vadd.f32 0.0, %v400
    %v402 = vpop.f32.mrb[0].mxu0
    %v403 = vpop.f32.mrb[0].mxu0
    %v404 = vadd.f32 0.0, %v403
    %v405 = vpop.f32.mrb[0].mxu0
    %406 = vmatprep.mubr.bf16.mxu0 0
    %407 = vmatmul.mubr.bf16.gmra.mrb[0].mxu0 %v255
    %v408 = vpop.f32.mrb[0].mxu0
    %v409 = vadd.f32 0.0, %v408
    %v410 = vpop.f32.mrb[0].mxu0
    %v411 = vpop.f32.mrb[0].mxu0
    %v412 = vadd.f32 0.0, %v411
    %v413 = vpop.f32.mrb[0].mxu0
    %414 = vmatprep.mubr.bf16.mxu0 0
    %415 = vmatmul.mubr.bf16.gmra.mrb[0].mxu0 %v258
    %v416 = vpop.f32.mrb[0].mxu0
    %v417 = vadd.f32 0.0, %v416
    %v418 = vpop.f32.mrb[0].mxu0
    %v419 = vpop.f32.mrb[0].mxu0
    %v420 = vadd.f32 0.0, %v419
    %v421 = vpop.f32.mrb[0].mxu0
    %422 = vmatprep.mubr.bf16.mxu0 0
    %423 = vmatmul.mubr.bf16.gmra.mrb[0].mxu0 %v261
    %v424 = vpop.f32.mrb[0].mxu0
    %v425 = vadd.f32 0.0, %v424
    %v426 = vpop.f32.mrb[0].mxu0
    %v427 = vpop.f32.mrb[0].mxu0
    %v428 = vadd.f32 0.0, %v427
    %v429 = vpop.f32.mrb[0].mxu0
    %430 = vmatprep.mubr.bf16.mxu0 0
    %431 = vmatmul.mubr.bf16.gmra.mrb[0].mxu0 %v264
    %v432 = vpop.f32.mrb[0].mxu0
    %v433 = vadd.f32 0.0, %v432
    %v434 = vpop.f32.mrb[0].mxu0
    %v435 = vpop.f32.mrb[0].mxu0
    %v436 = vadd.f32 0.0, %v435
    %v437 = vpop.f32.mrb[0].mxu0
    %438 = vmatprep.mubr.bf16.mxu0 0
    %439 = vmatmul.mubr.bf16.gmra.mrb[0].mxu0 %v267
    %v440 = vpop.f32.mrb[0].mxu0
    %v441 = vadd.f32 0.0, %v440
    %v442 = vpop.f32.mrb[0].mxu0
    %v443 = vpop.f32.mrb[0].mxu0
    %v444 = vadd.f32 0.0, %v443
    %v445 = vpop.f32.mrb[0].mxu0
    %446 = vmatprep.mubr.bf16.mxu0 0
    %447 = vmatmul.mubr.bf16.gmra.mrb[0].mxu0 %v270
    %v448 = vpop.f32.mrb[0].mxu0
    %v449 = vadd.f32 0.0, %v448
    %v450 = vpop.f32.mrb[0].mxu0
    %v451 = vpop.f32.mrb[0].mxu0
    %v452 = vadd.f32 0.0, %v451
    %v453 = vpop.f32.mrb[0].mxu0
    %454 = vmatprep.mubr.bf16.mxu0 0
    %455 = vmatmul.mubr.bf16.gmra.mrb[0].mxu0 %v273
    %v456 = vpop.f32.mrb[0].mxu0
    %v457 = vadd.f32 0.0, %v456
    %v458 = vpop.f32.mrb[0].mxu0
    %v459 = vpop.f32.mrb[0].mxu0
    %v460 = vadd.f32 0.0, %v459
    %v461 = vpop.f32.mrb[0].mxu0
    %462 = vmatprep.mubr.bf16.mxu0 0
    %463 = vmatmul.mubr.bf16.gmra.mrb[0].mxu0 %v276
    %v464 = vpop.f32.mrb[0].mxu0
    %v465 = vadd.f32 0.0, %v464
    %v466 = vpop.f32.mrb[0].mxu0
    %v467 = vpop.f32.mrb[0].mxu0
    %v468 = vadd.f32 0.0, %v467
    %v469 = vpop.f32.mrb[0].mxu0
    %470 = vmatprep.mubr.bf16.mxu0 0
    %471 = vmatmul.mubr.bf16.gmra.mrb[0].mxu0 %v279
    %v472 = vpop.f32.mrb[0].mxu0
    %v473 = vadd.f32 0.0, %v472
    %v474 = vpop.f32.mrb[0].mxu0
    %v475 = vpop.f32.mrb[0].mxu0
    %v476 = vadd.f32 0.0, %v475
    %v477 = vpop.f32.mrb[0].mxu0
    %478 = vmatprep.mubr.bf16.mxu0 0
    %479 = vmatmul.mubr.bf16.gmra.mrb[0].mxu0 %v282
    %v480 = vpop.f32.mrb[0].mxu0
    %v481 = vadd.f32 0.0, %v480
    %v482 = vpop.f32.mrb[0].mxu0
    %v483 = vpop.f32.mrb[0].mxu0
    %v484 = vadd.f32 0.0, %v483
    %v485 = vpop.f32.mrb[0].mxu0
    %486 = vmatprep.mubr.bf16.mxu0 0
    %487 = vmatmul.mubr.bf16.gmra.mrb[0].mxu0 %v285
    %v488 = vpop.f32.mrb[0].mxu0
    %v489 = vadd.f32 0.0, %v488
    %v490 = vpop.f32.mrb[0].mxu0
    %v491 = vpop.f32.mrb[0].mxu0
    %v492 = vadd.f32 0.0, %v491
    %v493 = vpop.f32.mrb[0].mxu0
    %494 = vmatprep.mubr.bf16.mxu0 0
    %495 = vmatmul.mubr.bf16.gmra.mrb[0].mxu0 %v288
    %v496 = vpop.f32.mrb[0].mxu0
    %v497 = vadd.f32 0.0, %v496
    %v498 = vpop.f32.mrb[0].mxu0
    %v499 = vpop.f32.mrb[0].mxu0
    %v500 = vadd.f32 0.0, %v499
    %v501 = vpop.f32.mrb[0].mxu0
    %502 = vmatprep.mubr.bf16.mxu0 0
    %503 = vmatmul.mubr.bf16.gmra.mrb[0].mxu0 %v291
    %v504 = vpop.f32.mrb[0].mxu0
    %v505 = vadd.f32 0.0, %v504
    %v506 = vpop.f32.mrb[0].mxu0
    %v507 = vpop.f32.mrb[0].mxu0
    %v508 = vadd.f32 0.0, %v507
    %v509 = vpop.f32.mrb[0].mxu0
    %510 = vmatprep.mubr.bf16.mxu0 0
    %511 = vmatmul.mubr.bf16.gmra.mrb[0].mxu0 %v294
    %v512 = vpop.f32.mrb[0].mxu0
    %v513 = vadd.f32 0.0, %v512
    %v514 = vpop.f32.mrb[0].mxu0
    %v515 = vpop.f32.mrb[0].mxu0
    %v516 = vadd.f32 0.0, %v515
    %v517 = vpop.f32.mrb[0].mxu0
    %518 = vmatprep.mubr.bf16.mxu0 0
    %519 = vmatmul.mubr.bf16.gmra.mrb[0].mxu0 %v297
    %v520 = vpop.f32.mrb[0].mxu0
    %v521 = vadd.f32 0.0, %v520
    %v522 = vpop.f32.mrb[0].mxu0
    %v523 = vpop.f32.mrb[0].mxu0
    %v524 = vadd.f32 0.0, %v523
    %v525 = vpop.f32.mrb[0].mxu0
    %526 = vmatprep.mubr.bf16.mxu0 0
    %527 = vmatmul.mubr.bf16.gmra.mrb[0].mxu0 %v300
    %v528 = vpop.f32.mrb[0].mxu0
    %v529 = vadd.f32 0.0, %v528
    %v530 = vpop.f32.mrb[0].mxu0
    %v531 = vpop.f32.mrb[0].mxu0
    %v532 = vadd.f32 0.0, %v531
    %v533 = vpop.f32.mrb[0].mxu0
    %534 = vmatprep.mubr.bf16.mxu0 0
    %535 = vmatmul.mubr.bf16.gmra.mrb[0].mxu0 %v303
    %v536 = vpop.f32.mrb[0].mxu0
    %v537 = vadd.f32 0.0, %v536
    %v538 = vpop.f32.mrb[0].mxu0
    %v539 = vpop.f32.mrb[0].mxu0
    %v540 = vadd.f32 0.0, %v539
    %v541 = vpop.f32.mrb[0].mxu0
    %542 = vmatprep.mubr.bf16.mxu0 0
    %543 = vmatmul.mubr.bf16.gmra.mrb[0].mxu0 %v306
    %v544 = vpop.f32.mrb[0].mxu0
    %v545 = vadd.f32 0.0, %v544
    %v546 = vpop.f32.mrb[0].mxu0
    %v547 = vpop.f32.mrb[0].mxu0
    %v548 = vadd.f32 0.0, %v547
    %v549 = vpop.f32.mrb[0].mxu0
    %550 = vmatprep.mubr.bf16.mxu0 0
    %551 = vmatmul.mubr.bf16.gmra.mrb[0].mxu0 %v309
    %v552 = vpop.f32.mrb[0].mxu0
    %v553 = vadd.f32 0.0, %v552
    %v554 = vpop.f32.mrb[0].mxu0
    %v555 = vpop.f32.mrb[0].mxu0
    %v556 = vadd.f32 0.0, %v555
    %v557 = vpop.f32.mrb[0].mxu0
    %558 = vmatprep.mubr.bf16.mxu0 0
    %559 = vmatmul.mubr.bf16.gmra.mrb[0].mxu0 %v312
    %v560 = vpop.f32.mrb[0].mxu0
    %v561 = vadd.f32 0.0, %v560
    %v562 = vpop.f32.mrb[0].mxu0
    %v563 = vpop.f32.mrb[0].mxu0
    %v564 = vadd.f32 0.0, %v563
    %v565 = vpop.f32.mrb[0].mxu0
    %566 = vmatprep.mubr.bf16.mxu0 0
    %567 = vmatmul.mubr.bf16.gmra.mrb[0].mxu0 %v315
    %v568 = vpop.f32.mrb[0].mxu0
    %v569 = vadd.f32 0.0, %v568
    %v570 = vpop.f32.mrb[0].mxu0
    %v571 = vpop.f32.mrb[0].mxu0
    %v572 = vadd.f32 0.0, %v571
    %v573 = vpop.f32.mrb[0].mxu0
    %574 = vmatprep.mubr.bf16.mxu0 0
    %575 = vmatmul.mubr.bf16.gmra.mrb[0].mxu0 %v318
    %v576 = vpop.f32.mrb[0].mxu0
    %v577 = vadd.f32 0.0, %v576
    %v578 = vpop.f32.mrb[0].mxu0
    %v579 = vpop.f32.mrb[0].mxu0
    %v580 = vadd.f32 0.0, %v579
    %v581 = vpop.f32.mrb[0].mxu0
    %582 = vmatprep.mubr.bf16.mxu0 0
    %583 = vmatmul.mubr.bf16.gmra.mrb[0].mxu0 %v321
    %v584 = vpop.f32.mrb[0].mxu0
    %v585 = vadd.f32 0.0, %v584
    %v586 = vpop.f32.mrb[0].mxu0
    %v587 = vpop.f32.mrb[0].mxu0
    %v588 = vadd.f32 0.0, %v587
    %v589 = vpop.f32.mrb[0].mxu0
    %590 = vmatprep.mubr.bf16.mxu0 0
    %591 = vmatmul.mubr.bf16.gmra.mrb[0].mxu0 %v324
    %v592 = vpop.f32.mrb[0].mxu0
    %v593 = vadd.f32 0.0, %v592
    %v594 = vpop.f32.mrb[0].mxu0
    %v595 = vpop.f32.mrb[0].mxu0
    %v596 = vadd.f32 0.0, %v595
    %v597 = vpop.f32.mrb[0].mxu0
    %598 = vmatprep.mubr.bf16.mxu0 0
    %599 = vmatmul.mubr.bf16.gmra.mrb[0].mxu0 %v327
    %v600 = vpop.f32.mrb[0].mxu0
    %v601 = vadd.f32 0.0, %v600
    %v602 = vpop.f32.mrb[0].mxu0
    %v603 = vpop.f32.mrb[0].mxu0
    %v604 = vadd.f32 0.0, %v603
    %v605 = vpop.f32.mrb[0].mxu0
    %606 = vmatprep.mubr.bf16.mxu0 0
    %607 = vmatmul.mubr.bf16.gmra.mrb[0].mxu0 %v330
    %v608 = vpop.f32.mrb[0].mxu0
    %v609 = vadd.f32 0.0, %v608
    %v610 = vpop.f32.mrb[0].mxu0
    %v611 = vpop.f32.mrb[0].mxu0
    %v612 = vadd.f32 0.0, %v611
    %v613 = vpop.f32.mrb[0].mxu0
    %614 = vmatprep.mubr.bf16.mxu0 0
    %615 = vmatmul.mubr.bf16.gmra.mrb[0].mxu0 %v333
    %v616 = vpop.f32.mrb[0].mxu0
    %v617 = vadd.f32 0.0, %v616
    %v618 = vpop.f32.mrb[0].mxu0
    %v619 = vpop.f32.mrb[0].mxu0
    %v620 = vadd.f32 0.0, %v619
    %v621 = vpop.f32.mrb[0].mxu0
    %622 = vmatprep.mubr.bf16.mxu0 0
    %623 = vmatmul.mubr.bf16.gmra.mrb[0].mxu0 %v336
    %v624 = vpop.f32.mrb[0].mxu0
    %v625 = vadd.f32 0.0, %v624
    %v626 = vpop.f32.mrb[0].mxu0
    %v627 = vpop.f32.mrb[0].mxu0
    %v628 = vadd.f32 0.0, %v627
    %v629 = vpop.f32.mrb[0].mxu0
    %630 = vdwg.mxu0
    %v631 = vld [vmem:[%s2] sm:$0xff]
    %v632 = vld [vmem:[%s2 + $0x8] sm:$0xff]
    %v633 = vld [vmem:[%s2 + $0x10] sm:$0xff]
    %v634 = vld [vmem:[%s2 + $0x18] sm:$0xff]
    %v635 = vld [vmem:[%s2 + $0x20] sm:$0xff]
    %v636 = vld [vmem:[%s2 + $0x28] sm:$0xff]
    %v637 = vld [vmem:[%s2 + $0x30] sm:$0xff]
    %v638 = vld [vmem:[%s2 + $0x38] sm:$0xff]
    %v639 = vld [vmem:[%s2 + $0x40] sm:$0xff]
    %v640 = vld [vmem:[%s2 + $0x48] sm:$0xff]
    %v641 = vld [vmem:[%s2 + $0x50] sm:$0xff]
    %v642 = vld [vmem:[%s2 + $0x58] sm:$0xff]
    %v643 = vld [vmem:[%s2 + $0x60] sm:$0xff]
    %v644 = vld [vmem:[%s2 + $0x68] sm:$0xff]
    %v645 = vld [vmem:[%s2 + $0x70] sm:$0xff]
    %v646 = vld [vmem:[%s2 + $0x78] sm:$0xff]
    %v647 = vld [vmem:[%s2 + $0x80] sm:$0xff]
    %v648 = vld [vmem:[%s2 + $0x88] sm:$0xff]
    %v649 = vld [vmem:[%s2 + $0x90] sm:$0xff]
    %v650 = vld [vmem:[%s2 + $0x98] sm:$0xff]
    %v651 = vld [vmem:[%s2 + $0xa0] sm:$0xff]
    %v652 = vld [vmem:[%s2 + $0xa8] sm:$0xff]
    %v653 = vld [vmem:[%s2 + $0xb0] sm:$0xff]
    %v654 = vld [vmem:[%s2 + $0xb8] sm:$0xff]
    %v655 = vld [vmem:[%s2 + $0xc0] sm:$0xff]
    %v656 = vld [vmem:[%s2 + $0xc8] sm:$0xff]
    %v657 = vld [vmem:[%s2 + $0xd0] sm:$0xff]
    %v658 = vld [vmem:[%s2 + $0xd8] sm:$0xff]
    %v659 = vld [vmem:[%s2 + $0xe0] sm:$0xff]
    %v660 = vld [vmem:[%s2 + $0xe8] sm:$0xff]
    %v661 = vld [vmem:[%s2 + $0xf0] sm:$0xff]
    %v662 = vld [vmem:[%s2 + $0xf8] sm:$0xff]
    %v663 = vld [vmem:[%s2 + $0x100] sm:$0xff]
    %v664 = vld [vmem:[%s2 + $0x108] sm:$0xff]
    %v665 = vld [vmem:[%s2 + $0x110] sm:$0xff]
    %v666 = vld [vmem:[%s2 + $0x118] sm:$0xff]
    %v667 = vld [vmem:[%s2 + $0x120] sm:$0xff]
    %v668 = vld [vmem:[%s2 + $0x128] sm:$0xff]
    %v669 = vld [vmem:[%s2 + $0x130] sm:$0xff]
    %v670 = vld [vmem:[%s2 + $0x138] sm:$0xff]
    %v671 = vld [vmem:[%s2 + $0x140] sm:$0xff]
    %v672 = vld [vmem:[%s2 + $0x148] sm:$0xff]
    %v673 = vld [vmem:[%s2 + $0x150] sm:$0xff]
    %v674 = vld [vmem:[%s2 + $0x158] sm:$0xff]
    %v675 = vld [vmem:[%s2 + $0x160] sm:$0xff]
    %v676 = vld [vmem:[%s2 + $0x168] sm:$0xff]
    %v677 = vld [vmem:[%s2 + $0x170] sm:$0xff]
    %v678 = vld [vmem:[%s2 + $0x178] sm:$0xff]
    %v679 = vld [vmem:[%s2 + $0x180] sm:$0xff]
    %v680 = vld [vmem:[%s2 + $0x188] sm:$0xff]
    %v681 = vld [vmem:[%s2 + $0x190] sm:$0xff]
    %v682 = vld [vmem:[%s2 + $0x198] sm:$0xff]
    %v683 = vld [vmem:[%s2 + $0x1a0] sm:$0xff]
    %v684 = vld [vmem:[%s2 + $0x1a8] sm:$0xff]
    %v685 = vld [vmem:[%s2 + $0x1b0] sm:$0xff]
    %v686 = vld [vmem:[%s2 + $0x1b8] sm:$0xff]
    %v687 = vld [vmem:[%s2 + $0x1c0] sm:$0xff]
    %v688 = vld [vmem:[%s2 + $0x1c8] sm:$0xff]
    %v689 = vld [vmem:[%s2 + $0x1d0] sm:$0xff]
    %v690 = vld [vmem:[%s2 + $0x1d8] sm:$0xff]
    %v691 = vld [vmem:[%s2 + $0x1e0] sm:$0xff]
    %v692 = vld [vmem:[%s2 + $0x1e8] sm:$0xff]
    %v693 = vld [vmem:[%s2 + $0x1f0] sm:$0xff]
    %v694 = vld [vmem:[%s2 + $0x1f8] sm:$0xff]
    %696 = vset.pattern.permute.xlu0 0
    %697 = vperm.xlu0 %696, %v631
    %v698 = vpop.permute.xlu0 %697
    %701 = vset.pattern.permute.xlu0 0
    %702 = vperm.xlu0 %701, %v632
    %v703 = vpop.permute.xlu0 %702
    %706 = vset.pattern.permute.xlu0 0
    %707 = vperm.xlu0 %706, %v633
    %v708 = vpop.permute.xlu0 %707
    %711 = vset.pattern.permute.xlu0 0
    %712 = vperm.xlu0 %711, %v634
    %v713 = vpop.permute.xlu0 %712
    %716 = vset.pattern.permute.xlu0 0
    %717 = vperm.xlu0 %716, %v635
    %v718 = vpop.permute.xlu0 %717
    %721 = vset.pattern.permute.xlu0 0
    %722 = vperm.xlu0 %721, %v636
    %v723 = vpop.permute.xlu0 %722
    %726 = vset.pattern.permute.xlu0 0
    %727 = vperm.xlu0 %726, %v637
    %v728 = vpop.permute.xlu0 %727
    %731 = vset.pattern.permute.xlu0 0
    %732 = vperm.xlu0 %731, %v638
    %v733 = vpop.permute.xlu0 %732
    %736 = vset.pattern.permute.xlu0 0
    %737 = vperm.xlu0 %736, %v639
    %v738 = vpop.permute.xlu0 %737
    %741 = vset.pattern.permute.xlu0 0
    %742 = vperm.xlu0 %741, %v640
    %v743 = vpop.permute.xlu0 %742
    %746 = vset.pattern.permute.xlu0 0
    %747 = vperm.xlu0 %746, %v641
    %v748 = vpop.permute.xlu0 %747
    %751 = vset.pattern.permute.xlu0 0
    %752 = vperm.xlu0 %751, %v642
    %v753 = vpop.permute.xlu0 %752
    %756 = vset.pattern.permute.xlu0 0
    %757 = vperm.xlu0 %756, %v643
    %v758 = vpop.permute.xlu0 %757
    %761 = vset.pattern.permute.xlu0 0
    %762 = vperm.xlu0 %761, %v644
    %v763 = vpop.permute.xlu0 %762
    %766 = vset.pattern.permute.xlu0 0
    %767 = vperm.xlu0 %766, %v645
    %v768 = vpop.permute.xlu0 %767
    %771 = vset.pattern.permute.xlu0 0
    %772 = vperm.xlu0 %771, %v646
    %v773 = vpop.permute.xlu0 %772
    %776 = vset.pattern.permute.xlu0 0
    %777 = vperm.xlu0 %776, %v647
    %v778 = vpop.permute.xlu0 %777
    %781 = vset.pattern.permute.xlu0 0
    %782 = vperm.xlu0 %781, %v648
    %v783 = vpop.permute.xlu0 %782
    %786 = vset.pattern.permute.xlu0 0
    %787 = vperm.xlu0 %786, %v649
    %v788 = vpop.permute.xlu0 %787
    %791 = vset.pattern.permute.xlu0 0
    %792 = vperm.xlu0 %791, %v650
    %v793 = vpop.permute.xlu0 %792
    %796 = vset.pattern.permute.xlu0 0
    %797 = vperm.xlu0 %796, %v651
    %v798 = vpop.permute.xlu0 %797
    %801 = vset.pattern.permute.xlu0 0
    %802 = vperm.xlu0 %801, %v652
    %v803 = vpop.permute.xlu0 %802
    %806 = vset.pattern.permute.xlu0 0
    %807 = vperm.xlu0 %806, %v653
    %v808 = vpop.permute.xlu0 %807
    %811 = vset.pattern.permute.xlu0 0
    %812 = vperm.xlu0 %811, %v654
    %v813 = vpop.permute.xlu0 %812
    %816 = vset.pattern.permute.xlu0 0
    %817 = vperm.xlu0 %816, %v655
    %v818 = vpop.permute.xlu0 %817
    %821 = vset.pattern.permute.xlu0 0
    %822 = vperm.xlu0 %821, %v656
    %v823 = vpop.permute.xlu0 %822
    %826 = vset.pattern.permute.xlu0 0
    %827 = vperm.xlu0 %826, %v657
    %v828 = vpop.permute.xlu0 %827
    %831 = vset.pattern.permute.xlu0 0
    %832 = vperm.xlu0 %831, %v658
    %v833 = vpop.permute.xlu0 %832
    %836 = vset.pattern.permute.xlu0 0
    %837 = vperm.xlu0 %836, %v659
    %v838 = vpop.permute.xlu0 %837
    %841 = vset.pattern.permute.xlu0 0
    %842 = vperm.xlu0 %841, %v660
    %v843 = vpop.permute.xlu0 %842
    %846 = vset.pattern.permute.xlu0 0
    %847 = vperm.xlu0 %846, %v661
    %v848 = vpop.permute.xlu0 %847
    %851 = vset.pattern.permute.xlu0 0
    %852 = vperm.xlu0 %851, %v662
    %v853 = vpop.permute.xlu0 %852
    %856 = vset.pattern.permute.xlu0 0
    %857 = vperm.xlu0 %856, %v663
    %v858 = vpop.permute.xlu0 %857
    %861 = vset.pattern.permute.xlu0 0
    %862 = vperm.xlu0 %861, %v664
    %v863 = vpop.permute.xlu0 %862
    %866 = vset.pattern.permute.xlu0 0
    %867 = vperm.xlu0 %866, %v665
    %v868 = vpop.permute.xlu0 %867
    %871 = vset.pattern.permute.xlu0 0
    %872 = vperm.xlu0 %871, %v666
    %v873 = vpop.permute.xlu0 %872
    %876 = vset.pattern.permute.xlu0 0
    %877 = vperm.xlu0 %876, %v667
    %v878 = vpop.permute.xlu0 %877
    %881 = vset.pattern.permute.xlu0 0
    %882 = vperm.xlu0 %881, %v668
    %v883 = vpop.permute.xlu0 %882
    %886 = vset.pattern.permute.xlu0 0
    %887 = vperm.xlu0 %886, %v669
    %v888 = vpop.permute.xlu0 %887
    %891 = vset.pattern.permute.xlu0 0
    %892 = vperm.xlu0 %891, %v670
    %v893 = vpop.permute.xlu0 %892
    %896 = vset.pattern.permute.xlu0 0
    %897 = vperm.xlu0 %896, %v671
    %v898 = vpop.permute.xlu0 %897
    %901 = vset.pattern.permute.xlu0 0
    %902 = vperm.xlu0 %901, %v672
    %v903 = vpop.permute.xlu0 %902
    %906 = vset.pattern.permute.xlu0 0
    %907 = vperm.xlu0 %906, %v673
    %v908 = vpop.permute.xlu0 %907
    %911 = vset.pattern.permute.xlu0 0
    %912 = vperm.xlu0 %911, %v674
    %v913 = vpop.permute.xlu0 %912
    %916 = vset.pattern.permute.xlu0 0
    %917 = vperm.xlu0 %916, %v675
    %v918 = vpop.permute.xlu0 %917
    %921 = vset.pattern.permute.xlu0 0
    %922 = vperm.xlu0 %921, %v676
    %v923 = vpop.permute.xlu0 %922
    %926 = vset.pattern.permute.xlu0 0
    %927 = vperm.xlu0 %926, %v677
    %v928 = vpop.permute.xlu0 %927
    %931 = vset.pattern.permute.xlu0 0
    %932 = vperm.xlu0 %931, %v678
    %v933 = vpop.permute.xlu0 %932
    %936 = vset.pattern.permute.xlu0 0
    %937 = vperm.xlu0 %936, %v679
    %v938 = vpop.permute.xlu0 %937
    %941 = vset.pattern.permute.xlu0 0
    %942 = vperm.xlu0 %941, %v680
    %v943 = vpop.permute.xlu0 %942
    %946 = vset.pattern.permute.xlu0 0
    %947 = vperm.xlu0 %946, %v681
    %v948 = vpop.permute.xlu0 %947
    %951 = vset.pattern.permute.xlu0 0
    %952 = vperm.xlu0 %951, %v682
    %v953 = vpop.permute.xlu0 %952
    %956 = vset.pattern.permute.xlu0 0
    %957 = vperm.xlu0 %956, %v683
    %v958 = vpop.permute.xlu0 %957
    %961 = vset.pattern.permute.xlu0 0
    %962 = vperm.xlu0 %961, %v684
    %v963 = vpop.permute.xlu0 %962
    %966 = vset.pattern.permute.xlu0 0
    %967 = vperm.xlu0 %966, %v685
    %v968 = vpop.permute.xlu0 %967
    %971 = vset.pattern.permute.xlu0 0
    %972 = vperm.xlu0 %971, %v686
    %v973 = vpop.permute.xlu0 %972
    %976 = vset.pattern.permute.xlu0 0
    %977 = vperm.xlu0 %976, %v687
    %v978 = vpop.permute.xlu0 %977
    %981 = vset.pattern.permute.xlu0 0
    %982 = vperm.xlu0 %981, %v688
    %v983 = vpop.permute.xlu0 %982
    %986 = vset.pattern.permute.xlu0 0
    %987 = vperm.xlu0 %986, %v689
    %v988 = vpop.permute.xlu0 %987
    %991 = vset.pattern.permute.xlu0 0
    %992 = vperm.xlu0 %991, %v690
    %v993 = vpop.permute.xlu0 %992
    %996 = vset.pattern.permute.xlu0 0
    %997 = vperm.xlu0 %996, %v691
    %v998 = vpop.permute.xlu0 %997
    %1001 = vset.pattern.permute.xlu0 0
    %1002 = vperm.xlu0 %1001, %v692
    %v1003 = vpop.permute.xlu0 %1002
    %1006 = vset.pattern.permute.xlu0 0
    %1007 = vperm.xlu0 %1006, %v693
    %v1008 = vpop.permute.xlu0 %1007
    %1011 = vset.pattern.permute.xlu0 0
    %1012 = vperm.xlu0 %1011, %v694
    %v1013 = vpop.permute.xlu0 %1012
    %v1015 = vmul.f32 %v377, %v698
    %v1016 = vmul.f32 %v380, %v703
    %v1017 = vmul.f32 %v385, %v708
    %v1018 = vmul.f32 %v388, %v713
    %v1019 = vmul.f32 %v393, %v718
    %v1020 = vmul.f32 %v396, %v723
    %v1021 = vmul.f32 %v401, %v728
    %v1022 = vmul.f32 %v404, %v733
    %v1023 = vmul.f32 %v409, %v738
    %v1024 = vmul.f32 %v412, %v743
    %v1025 = vmul.f32 %v417, %v748
    %v1026 = vmul.f32 %v420, %v753
    %v1027 = vmul.f32 %v425, %v758
    %v1028 = vmul.f32 %v428, %v763
    %v1029 = vmul.f32 %v433, %v768
    %v1030 = vmul.f32 %v436, %v773
    %v1031 = vmul.f32 %v441, %v778
    %v1032 = vmul.f32 %v444, %v783
    %v1033 = vmul.f32 %v449, %v788
    %v1034 = vmul.f32 %v452, %v793
    %v1035 = vmul.f32 %v457, %v798
    %v1036 = vmul.f32 %v460, %v803
    %v1037 = vmul.f32 %v465, %v808
    %v1038 = vmul.f32 %v468, %v813
    %v1039 = vmul.f32 %v473, %v818
    %v1040 = vmul.f32 %v476, %v823
    %v1041 = vmul.f32 %v481, %v828
    %v1042 = vmul.f32 %v484, %v833
    %v1043 = vmul.f32 %v489, %v838
    %v1044 = vmul.f32 %v492, %v843
    %v1045 = vmul.f32 %v497, %v848
    %v1046 = vmul.f32 %v500, %v853
    %v1047 = vmul.f32 %v505, %v858
    %v1048 = vmul.f32 %v508, %v863
    %v1049 = vmul.f32 %v513, %v868
    %v1050 = vmul.f32 %v516, %v873
    %v1051 = vmul.f32 %v521, %v878
    %v1052 = vmul.f32 %v524, %v883
    %v1053 = vmul.f32 %v529, %v888
    %v1054 = vmul.f32 %v532, %v893
    %v1055 = vmul.f32 %v537, %v898
    %v1056 = vmul.f32 %v540, %v903
    %v1057 = vmul.f32 %v545, %v908
    %v1058 = vmul.f32 %v548, %v913
    %v1059 = vmul.f32 %v553, %v918
    %v1060 = vmul.f32 %v556, %v923
    %v1061 = vmul.f32 %v561, %v928
    %v1062 = vmul.f32 %v564, %v933
    %v1063 = vmul.f32 %v569, %v938
    %v1064 = vmul.f32 %v572, %v943
    %v1065 = vmul.f32 %v577, %v948
    %v1066 = vmul.f32 %v580, %v953
    %v1067 = vmul.f32 %v585, %v958
    %v1068 = vmul.f32 %v588, %v963
    %v1069 = vmul.f32 %v593, %v968
    %v1070 = vmul.f32 %v596, %v973
    %v1071 = vmul.f32 %v601, %v978
    %v1072 = vmul.f32 %v604, %v983
    %v1073 = vmul.f32 %v609, %v988
    %v1074 = vmul.f32 %v612, %v993
    %v1075 = vmul.f32 %v617, %v998
    %v1076 = vmul.f32 %v620, %v1003
    %v1077 = vmul.f32 %v625, %v1008
    %v1078 = vmul.f32 %v628, %v1013
    %v1079 = vpack.c.bf16 %v1016, %v1015
    %v1080 = vpack.c.bf16 %v1018, %v1017
    %v1081 = vpack.c.bf16 %v1020, %v1019
    %v1082 = vpack.c.bf16 %v1022, %v1021
    %v1083 = vpack.c.bf16 %v1024, %v1023
    %v1084 = vpack.c.bf16 %v1026, %v1025
    %v1085 = vpack.c.bf16 %v1028, %v1027
    %v1086 = vpack.c.bf16 %v1030, %v1029
    %v1087 = vpack.c.bf16 %v1032, %v1031
    %v1088 = vpack.c.bf16 %v1034, %v1033
    %v1089 = vpack.c.bf16 %v1036, %v1035
    %v1090 = vpack.c.bf16 %v1038, %v1037
    %v1091 = vpack.c.bf16 %v1040, %v1039
    %v1092 = vpack.c.bf16 %v1042, %v1041
    %v1093 = vpack.c.bf16 %v1044, %v1043
    %v1094 = vpack.c.bf16 %v1046, %v1045
    %v1095 = vpack.c.bf16 %v1048, %v1047
    %v1096 = vpack.c.bf16 %v1050, %v1049
    %v1097 = vpack.c.bf16 %v1052, %v1051
    %v1098 = vpack.c.bf16 %v1054, %v1053
    %v1099 = vpack.c.bf16 %v1056, %v1055
    %v1100 = vpack.c.bf16 %v1058, %v1057
    %v1101 = vpack.c.bf16 %v1060, %v1059
    %v1102 = vpack.c.bf16 %v1062, %v1061
    %v1103 = vpack.c.bf16 %v1064, %v1063
    %v1104 = vpack.c.bf16 %v1066, %v1065
    %v1105 = vpack.c.bf16 %v1068, %v1067
    %v1106 = vpack.c.bf16 %v1070, %v1069
    %v1107 = vpack.c.bf16 %v1072, %v1071
    %v1108 = vpack.c.bf16 %v1074, %v1073
    %v1109 = vpack.c.bf16 %v1076, %v1075
    %v1110 = vpack.c.bf16 %v1078, %v1077
    %v1143 = vunpack.c.l.b16 %v1079
    %v1144 = vunpack.c.h.b16 %v1079
    %v1145 = vunpack.c.l.b16 %v1080
    %v1146 = vunpack.c.h.b16 %v1080
    %v1147 = vunpack.c.l.b16 %v1081
    %v1148 = vunpack.c.h.b16 %v1081
    %v1149 = vunpack.c.l.b16 %v1082
    %v1150 = vunpack.c.h.b16 %v1082
    %v1151 = vunpack.c.l.b16 %v1083
    %v1152 = vunpack.c.h.b16 %v1083
    %v1153 = vunpack.c.l.b16 %v1084
    %v1154 = vunpack.c.h.b16 %v1084
    %v1155 = vunpack.c.l.b16 %v1085
    %v1156 = vunpack.c.h.b16 %v1085
    %v1157 = vunpack.c.l.b16 %v1086
    %v1158 = vunpack.c.h.b16 %v1086
    %v1159 = vunpack.c.l.b16 %v1087
    %v1160 = vunpack.c.h.b16 %v1087
    %v1161 = vunpack.c.l.b16 %v1088
    %v1162 = vunpack.c.h.b16 %v1088
    %v1163 = vunpack.c.l.b16 %v1089
    %v1164 = vunpack.c.h.b16 %v1089
    %v1165 = vunpack.c.l.b16 %v1090
    %v1166 = vunpack.c.h.b16 %v1090
    %v1167 = vunpack.c.l.b16 %v1091
    %v1168 = vunpack.c.h.b16 %v1091
    %v1169 = vunpack.c.l.b16 %v1092
    %v1170 = vunpack.c.h.b16 %v1092
    %v1171 = vunpack.c.l.b16 %v1093
    %v1172 = vunpack.c.h.b16 %v1093
    %v1173 = vunpack.c.l.b16 %v1094
    %v1174 = vunpack.c.h.b16 %v1094
    %v1175 = vunpack.c.l.b16 %v1095
    %v1176 = vunpack.c.h.b16 %v1095
    %v1177 = vunpack.c.l.b16 %v1096
    %v1178 = vunpack.c.h.b16 %v1096
    %v1179 = vunpack.c.l.b16 %v1097
    %v1180 = vunpack.c.h.b16 %v1097
    %v1181 = vunpack.c.l.b16 %v1098
    %v1182 = vunpack.c.h.b16 %v1098
    %v1183 = vunpack.c.l.b16 %v1099
    %v1184 = vunpack.c.h.b16 %v1099
    %v1185 = vunpack.c.l.b16 %v1100
    %v1186 = vunpack.c.h.b16 %v1100
    %v1187 = vunpack.c.l.b16 %v1101
    %v1188 = vunpack.c.h.b16 %v1101
    %v1189 = vunpack.c.l.b16 %v1102
    %v1190 = vunpack.c.h.b16 %v1102
    %v1191 = vunpack.c.l.b16 %v1103
    %v1192 = vunpack.c.h.b16 %v1103
    %v1193 = vunpack.c.l.b16 %v1104
    %v1194 = vunpack.c.h.b16 %v1104
    %v1195 = vunpack.c.l.b16 %v1105
    %v1196 = vunpack.c.h.b16 %v1105
    %v1197 = vunpack.c.l.b16 %v1106
    %v1198 = vunpack.c.h.b16 %v1106
    %v1199 = vunpack.c.l.b16 %v1107
    %v1200 = vunpack.c.h.b16 %v1107
    %v1201 = vunpack.c.l.b16 %v1108
    %v1202 = vunpack.c.h.b16 %v1108
    %v1203 = vunpack.c.l.b16 %v1109
    %v1204 = vunpack.c.h.b16 %v1109
    %v1205 = vunpack.c.l.b16 %v1110
    %v1206 = vunpack.c.h.b16 %v1110
    %v1207 = vpack.c.b16 %v1143, %v1143
    %v1208 = vpack.c.b16 %v1144, %v1144
    %v1209 = vpack.c.b16 %v1145, %v1145
    %v1210 = vpack.c.b16 %v1146, %v1146
    %v1211 = vpack.c.b16 %v1147, %v1147
    %v1212 = vpack.c.b16 %v1148, %v1148
    %v1213 = vpack.c.b16 %v1149, %v1149
    %v1214 = vpack.c.b16 %v1150, %v1150
    %v1215 = vpack.c.b16 %v1151, %v1151
    %v1216 = vpack.c.b16 %v1152, %v1152
    %v1217 = vpack.c.b16 %v1153, %v1153
    %v1218 = vpack.c.b16 %v1154, %v1154
    %v1219 = vpack.c.b16 %v1155, %v1155
    %v1220 = vpack.c.b16 %v1156, %v1156
    %v1221 = vpack.c.b16 %v1157, %v1157
    %v1222 = vpack.c.b16 %v1158, %v1158
    %v1223 = vpack.c.b16 %v1159, %v1159
    %v1224 = vpack.c.b16 %v1160, %v1160
    %v1225 = vpack.c.b16 %v1161, %v1161
    %v1226 = vpack.c.b16 %v1162, %v1162
    %v1227 = vpack.c.b16 %v1163, %v1163
    %v1228 = vpack.c.b16 %v1164, %v1164
    %v1229 = vpack.c.b16 %v1165, %v1165
    %v1230 = vpack.c.b16 %v1166, %v1166
    %v1231 = vpack.c.b16 %v1167, %v1167
    %v1232 = vpack.c.b16 %v1168, %v1168
    %v1233 = vpack.c.b16 %v1169, %v1169
    %v1234 = vpack.c.b16 %v1170, %v1170
    %v1235 = vpack.c.b16 %v1171, %v1171
    %v1236 = vpack.c.b16 %v1172, %v1172
    %v1237 = vpack.c.b16 %v1173, %v1173
    %v1238 = vpack.c.b16 %v1174, %v1174
    %v1239 = vpack.c.b16 %v1175, %v1175
    %v1240 = vpack.c.b16 %v1176, %v1176
    %v1241 = vpack.c.b16 %v1177, %v1177
    %v1242 = vpack.c.b16 %v1178, %v1178
    %v1243 = vpack.c.b16 %v1179, %v1179
    %v1244 = vpack.c.b16 %v1180, %v1180
    %v1245 = vpack.c.b16 %v1181, %v1181
    %v1246 = vpack.c.b16 %v1182, %v1182
    %v1247 = vpack.c.b16 %v1183, %v1183
    %v1248 = vpack.c.b16 %v1184, %v1184
    %v1249 = vpack.c.b16 %v1185, %v1185
    %v1250 = vpack.c.b16 %v1186, %v1186
    %v1251 = vpack.c.b16 %v1187, %v1187
    %v1252 = vpack.c.b16 %v1188, %v1188
    %v1253 = vpack.c.b16 %v1189, %v1189
    %v1254 = vpack.c.b16 %v1190, %v1190
    %v1255 = vpack.c.b16 %v1191, %v1191
    %v1256 = vpack.c.b16 %v1192, %v1192
    %v1257 = vpack.c.b16 %v1193, %v1193
    %v1258 = vpack.c.b16 %v1194, %v1194
    %v1259 = vpack.c.b16 %v1195, %v1195
    %v1260 = vpack.c.b16 %v1196, %v1196
    %v1261 = vpack.c.b16 %v1197, %v1197
    %v1262 = vpack.c.b16 %v1198, %v1198
    %v1263 = vpack.c.b16 %v1199, %v1199
    %v1264 = vpack.c.b16 %v1200, %v1200
    %v1265 = vpack.c.b16 %v1201, %v1201
    %v1266 = vpack.c.b16 %v1202, %v1202
    %v1267 = vpack.c.b16 %v1203, %v1203
    %v1268 = vpack.c.b16 %v1204, %v1204
    %v1269 = vpack.c.b16 %v1205, %v1205
    %v1270 = vpack.c.b16 %v1206, %v1206
    %1335 = vst [vmem:[#allocation2] sm:$0xf] %v1207
    %1336 = vst [vmem:[#allocation2 + $0x4] sm:$0xf] %v1208
    %1337 = vst [vmem:[#allocation2 + $0x8] sm:$0xf] %v1209
    %1338 = vst [vmem:[#allocation2 + $0xc] sm:$0xf] %v1210
    %1339 = vst [vmem:[#allocation2 + $0x10] sm:$0xf] %v1211
    %1340 = vst [vmem:[#allocation2 + $0x14] sm:$0xf] %v1212
    %1341 = vst [vmem:[#allocation2 + $0x18] sm:$0xf] %v1213
    %1342 = vst [vmem:[#allocation2 + $0x1c] sm:$0xf] %v1214
    %1343 = vst [vmem:[#allocation2 + $0x20] sm:$0xf] %v1215
    %1344 = vst [vmem:[#allocation2 + $0x24] sm:$0xf] %v1216
    %1345 = vst [vmem:[#allocation2 + $0x28] sm:$0xf] %v1217
    %1346 = vst [vmem:[#allocation2 + $0x2c] sm:$0xf] %v1218
    %1347 = vst [vmem:[#allocation2 + $0x30] sm:$0xf] %v1219
    %1348 = vst [vmem:[#allocation2 + $0x34] sm:$0xf] %v1220
    %1349 = vst [vmem:[#allocation2 + $0x38] sm:$0xf] %v1221
    %1350 = vst [vmem:[#allocation2 + $0x3c] sm:$0xf] %v1222
    %1351 = vst [vmem:[#allocation2 + $0x40] sm:$0xf] %v1223
    %1352 = vst [vmem:[#allocation2 + $0x44] sm:$0xf] %v1224
    %1353 = vst [vmem:[#allocation2 + $0x48] sm:$0xf] %v1225
    %1354 = vst [vmem:[#allocation2 + $0x4c] sm:$0xf] %v1226
    %1355 = vst [vmem:[#allocation2 + $0x50] sm:$0xf] %v1227
    %1356 = vst [vmem:[#allocation2 + $0x54] sm:$0xf] %v1228
    %1357 = vst [vmem:[#allocation2 + $0x58] sm:$0xf] %v1229
    %1358 = vst [vmem:[#allocation2 + $0x5c] sm:$0xf] %v1230
    %1359 = vst [vmem:[#allocation2 + $0x60] sm:$0xf] %v1231
    %1360 = vst [vmem:[#allocation2 + $0x64] sm:$0xf] %v1232
    %1361 = vst [vmem:[#allocation2 + $0x68] sm:$0xf] %v1233
    %1362 = vst [vmem:[#allocation2 + $0x6c] sm:$0xf] %v1234
    %1363 = vst [vmem:[#allocation2 + $0x70] sm:$0xf] %v1235
    %1364 = vst [vmem:[#allocation2 + $0x74] sm:$0xf] %v1236
    %1365 = vst [vmem:[#allocation2 + $0x78] sm:$0xf] %v1237
    %1366 = vst [vmem:[#allocation2 + $0x7c] sm:$0xf] %v1238
    %1367 = vst [vmem:[#allocation2 + $0x80] sm:$0xf] %v1239
    %1368 = vst [vmem:[#allocation2 + $0x84] sm:$0xf] %v1240
    %1369 = vst [vmem:[#allocation2 + $0x88] sm:$0xf] %v1241
    %1370 = vst [vmem:[#allocation2 + $0x8c] sm:$0xf] %v1242
    %1371 = vst [vmem:[#allocation2 + $0x90] sm:$0xf] %v1243
    %1372 = vst [vmem:[#allocation2 + $0x94] sm:$0xf] %v1244
    %1373 = vst [vmem:[#allocation2 + $0x98] sm:$0xf] %v1245
    %1374 = vst [vmem:[#allocation2 + $0x9c] sm:$0xf] %v1246
    %1375 = vst [vmem:[#allocation2 + $0xa0] sm:$0xf] %v1247
    %1376 = vst [vmem:[#allocation2 + $0xa4] sm:$0xf] %v1248
    %1377 = vst [vmem:[#allocation2 + $0xa8] sm:$0xf] %v1249
    %1378 = vst [vmem:[#allocation2 + $0xac] sm:$0xf] %v1250
    %1379 = vst [vmem:[#allocation2 + $0xb0] sm:$0xf] %v1251
    %1380 = vst [vmem:[#allocation2 + $0xb4] sm:$0xf] %v1252
    %1381 = vst [vmem:[#allocation2 + $0xb8] sm:$0xf] %v1253
    %1382 = vst [vmem:[#allocation2 + $0xbc] sm:$0xf] %v1254
    %1383 = vst [vmem:[#allocation2 + $0xc0] sm:$0xf] %v1255
    %1384 = vst [vmem:[#allocation2 + $0xc4] sm:$0xf] %v1256
    %1385 = vst [vmem:[#allocation2 + $0xc8] sm:$0xf] %v1257
    %1386 = vst [vmem:[#allocation2 + $0xcc] sm:$0xf] %v1258
    %1387 = vst [vmem:[#allocation2 + $0xd0] sm:$0xf] %v1259
    %1388 = vst [vmem:[#allocation2 + $0xd4] sm:$0xf] %v1260
    %1389 = vst [vmem:[#allocation2 + $0xd8] sm:$0xf] %v1261
    %1390 = vst [vmem:[#allocation2 + $0xdc] sm:$0xf] %v1262
    %1391 = vst [vmem:[#allocation2 + $0xe0] sm:$0xf] %v1263
    %1392 = vst [vmem:[#allocation2 + $0xe4] sm:$0xf] %v1264
    %1393 = vst [vmem:[#allocation2 + $0xe8] sm:$0xf] %v1265
    %1394 = vst [vmem:[#allocation2 + $0xec] sm:$0xf] %v1266
    %1395 = vst [vmem:[#allocation2 + $0xf0] sm:$0xf] %v1267
    %1396 = vst [vmem:[#allocation2 + $0xf4] sm:$0xf] %v1268
    %1397 = vst [vmem:[#allocation2 + $0xf8] sm:$0xf] %v1269
    %1398 = vst [vmem:[#allocation2 + $0xfc] sm:$0xf] %v1270
    // Predicated region
    $region14: #{tpu_custom_call.1} parent=1 // pred_check
      _
    $region15: #{tpu_custom_call.1} parent=1 // pred_check_branch
      %1400 = sbr.rel (0) target = $region17
    $region16: #{tpu_custom_call.1} parent=1 // pred_region
      %s1402 = ssub.s32 4096, 4096
      %1403 = vsyncadd [#allocation3], %s1402
      %s1404 = sshll.u32 [#allocation2], 4
      %s1405 = int_to_ptr.vmem [resolvable:$true] %s1404
      %1410 = dma.vmem_to_hbm [thread:$0]  %s1405, 4096, %s3, [#allocation3], 64, 64, 4
    $region17: #{tpu_custom_call.1} parent=1 // pred_fallthru
      _
    // Predicated region
    $region18: #{tpu_custom_call.1} parent=1 // pred_check
      _
    $region19: #{tpu_custom_call.1} parent=1 // pred_check_branch
      %1412 = sbr.rel (0) target = $region21
    $region20: #{tpu_custom_call.1} parent=1 // pred_region
      %1413 = dma.done [#allocation3], 4096
    $region21: #{tpu_custom_call.1} parent=1 // pred_fallthru
      _
    %1414 = vsyncpa [#allocation3], 1

</llo_original>
